<compile_context>
chip_gen: v7x
topology: tpu7x:2x2x1
jax: 0.10.0
libtpu: 0.0.40
codegen_flags: <defaults>
</compile_context>

<pallas_src>
import jax
import jax.numpy as jnp
from jax.experimental import pallas as pl
from jax.experimental.pallas import tpu as pltpu

_MIB = 1 << 20
_VMEM_LIMIT_FLOOR = 32 * _MIB      # raise v5e's 16 MiB scoped-VMEM default
_MIN_BLOCK_BYTES = 512 * 1024      # don't shrink blocks below ~0.5 MiB


def _embeddings_kernel(x_ref, pos_ref, o_ref):
    # pos_ref is a (1, tc) tile shared by every batch row in the block; jnp
    # broadcasting against the (tb, tc) x tile stays in vregs.  The add runs
    # in the promoted dtype (e.g. bf16 x + f32 pos -> f32) and is rounded to
    # x's dtype only at the store, matching PyTorch promote-then-round.
    # TODO(synk): non-zero dropout would need pltpu.prng_seed +
    # pltpu.prng_random_bits masking; the module uses p=0.0 -> identity.
    o_ref[...] = (x_ref[...] + pos_ref[...]).astype(o_ref.dtype)


def _tuning_constants():
    """(target_block_bytes, vmem_limit_ceiling) per TPU generation."""
    try:
        vmem_cap = pltpu.get_tpu_info().vmem_capacity_bytes
    except Exception:
        vmem_cap = 64 * _MIB                 # be conservative (v7x-sized VMEM)
    if vmem_cap >= 100 * _MIB:               # v5e / v6e: 128 MiB physical VMEM
        return 6 * _MIB, 64 * _MIB
    return 2 * _MIB, 40 * _MIB               # v7x: 64 MiB physical VMEM


def _choose_tiles(B, C, itemsize, target_block_bytes):
    """Pick (tb, tc): batch rows and flattened-(S*H) chunk per block.

    Invariants (so every block shape is legal and lane-dense):
      * tb is a multiple of the dtype's packed sublane height, or tb == B,
      * tc is a multiple of 128, or tc == C,
      * tb * tc * itemsize <= ~target_block_bytes.
    """
    sub = max(8, 32 // itemsize)             # 8 f32 / 16 bf16 / 32 int8,fp8
    budget = max(128, target_block_bytes // itemsize)   # elements per block

    # Batch rows per block.
    if B <= sub:
        tb = B
    else:
        rows_fit = (budget // max(1, C)) // sub * sub
        tb = B if rows_fit >= B else max(sub, rows_fit)

    # Lane chunk over the flattened S*H dim.
    per_row = max(1, budget // tb)
    if C <= per_row:
        tc = C
    else:
        tc = min(C, max(128, per_row // 128 * 128))

    # Prefer >=4 grid steps (2 per v7x TensorCore) when there is enough data:
    # shrink the batch tile first (keeps lane width maximal), then the chunk.
    total_bytes = B * C * itemsize

    def _steps(tb_, tc_):
        return pl.cdiv(B, tb_) * pl.cdiv(C, tc_)

    if total_bytes >= 4 * _MIN_BLOCK_BYTES:
        while _steps(tb, tc) < 4 and tb > sub:
            new_tb = max(sub, (tb // 2) // sub * sub)
            if new_tb >= tb:
                break
            tb = new_tb
        while (_steps(tb, tc) < 4 and tc > 128
               and tb * tc * itemsize > 2 * _MIN_BLOCK_BYTES):
            new_tc = max(128, (tc // 2) // 128 * 128)
            if new_tc >= tc:
                break
            tc = new_tc

    return tb, tc


def embeddings_forward(x, position_embeddings, *, target_block_bytes=None):
    """x: (B, S, H); position_embeddings: (1, S, H); returns (B, S, H)."""
    B, S, H = x.shape
    assert position_embeddings.shape == (1, S, H)
    C = S * H

    target_default, vmem_ceiling = _tuning_constants()
    if target_block_bytes is None:
        target_block_bytes = target_default
    # Keep the (double-buffered) footprint safely below the per-gen ceiling.
    target_block_bytes = min(target_block_bytes, vmem_ceiling // 8)

    itemsize = x.dtype.itemsize
    pos_itemsize = position_embeddings.dtype.itemsize
    tb, tc = _choose_tiles(B, C, itemsize, target_block_bytes)

    grid = (pl.cdiv(B, tb), pl.cdiv(C, tc))

    # Lane-dense flattened layout: last block dim is tc (multiple of 128 or
    # the full flattened row), so stores are unmasked full-lane vst's.
    x_in = x.reshape(B, C)
    pos_in = position_embeddings.reshape(1, C)

    # VMEM: x and out blocks double-buffered by the pipeline; the pos chunk
    # follows the lane axis, so count it double-buffered too.
    block_bytes = tb * tc * itemsize
    vmem_need = 4 * block_bytes + 2 * tc * pos_itemsize
    vmem_limit = int(min(max(vmem_need + 2 * _MIB, _VMEM_LIMIT_FLOOR),
                         vmem_ceiling))
    assert vmem_limit >= vmem_need, (vmem_limit, vmem_need)

    out = pl.pallas_call(
        _embeddings_kernel,
        out_shape=jax.ShapeDtypeStruct((B, C), x.dtype),
        grid_spec=pl.GridSpec(
            grid=grid,
            in_specs=[
                pl.BlockSpec((tb, tc), lambda i, j: (i, j)),   # x tile
                pl.BlockSpec((1, tc), lambda i, j: (0, j)),    # pos (broadcast)
            ],
            out_specs=pl.BlockSpec((tb, tc), lambda i, j: (i, j)),
        ),
        compiler_params=pltpu.CompilerParams(
            dimension_semantics=("parallel", "parallel"),
            vmem_limit_bytes=vmem_limit,
        ),
        # Donate x's HBM buffer to the output (same shape/dtype): no extra
        # B*S*H output allocation around the kernel.
        input_output_aliases={0: 0},
    )(x_in, pos_in)

    return out.reshape(B, S, H)


if __name__ == "__main__":
    key = jax.random.PRNGKey(0)
    kx, kp, kx2, kx3, kp3 = jax.random.split(key, 5)

    # Case 1: small shapes consistent with the module: batch=2, seq=8, hidden=32.
    B, S, H = 2, 8, 32
    x = jax.random.normal(kx, (B, S, H), dtype=jnp.float32)
    # Module __init__ uses zeros; random values actually exercise the add.
    pos = jax.random.normal(kp, (1, S, H), dtype=jnp.float32)
    ref = x + pos                              # dropout(p=0.0) == identity
    out = jax.block_until_ready(embeddings_forward(x, pos))
    assert out.shape == (B, S, H)
    assert out.dtype == x.dtype
    assert jnp.allclose(out, ref, atol=1e-6, rtol=1e-6)

    # Case 2: non-divisible batch (B=10, tb=8) -> cdiv grid with a partial
    # last batch block (masked by the pipeline, no 3-D fallback path).
    B2 = 10
    x2 = jax.random.normal(kx2, (B2, S, H), dtype=jnp.float32)
    ref2 = x2 + pos
    out2 = jax.block_until_ready(
        embeddings_forward(x2, pos, target_block_bytes=8 * 1024))
    assert jnp.allclose(out2, ref2, atol=1e-6, rtol=1e-6)

    # Case 3: bf16 activations + f32 position parameter, with a row larger
    # than the block budget -> lane-axis (S*H) chunking, multiple grid steps.
    S3, H3 = 8, 512
    x3 = jax.random.normal(kx3, (2, S3, H3), dtype=jnp.bfloat16)
    pos3 = jax.random.normal(kp3, (1, S3, H3), dtype=jnp.float32)
    ref3 = (x3.astype(jnp.float32) + pos3).astype(jnp.bfloat16)
    out3 = jax.block_until_ready(
        embeddings_forward(x3, pos3, target_block_bytes=8 * 1024))
    assert out3.dtype == jnp.bfloat16
    assert jnp.allclose(out3.astype(jnp.float32), ref3.astype(jnp.float32),
                        atol=2e-2, rtol=2e-2)

    print("KERNEL_OK")
</pallas_src>

<mosaic_0001>
module attributes {stable_mosaic.version = 11 : i64} {
  func.func @_embeddings_kernel(%arg0: i32, %arg1: i32, %arg2: memref<2x256xf32, #tpu.memory_space<vmem>>, %arg3: memref<1x256xf32, #tpu.memory_space<vmem>>, %arg4: memref<2x256xf32, #tpu.memory_space<vmem>>) attributes {dimension_semantics = [#tpu.dimension_semantics<parallel>, #tpu.dimension_semantics<parallel>], iteration_bounds = array<i64: 1, 1>, scalar_prefetch = 0 : i64, scratch_operands = 0 : i64, tpu.core_type = #tpu.core_type<tc>, window_params = [{transform_indices = @transform_0, window_bounds = array<i64: 2, 256>}, {transform_indices = @transform_1, window_bounds = array<i64: 1, 256>}, {transform_indices = @transform_2, window_bounds = array<i64: 2, 256>}]} {
    %c0 = arith.constant 0 : index
    %c0_0 = arith.constant 0 : index
    %0 = vector.load %arg2[%c0, %c0_0] : memref<2x256xf32, #tpu.memory_space<vmem>>, vector<2x256xf32>
    %c0_1 = arith.constant 0 : index
    %c0_2 = arith.constant 0 : index
    %1 = vector.load %arg3[%c0_1, %c0_2] : memref<1x256xf32, #tpu.memory_space<vmem>>, vector<1x256xf32>
    %2 = vector.broadcast %1 : vector<1x256xf32> to vector<2x256xf32>
    %3 = arith.addf %0, %2 : vector<2x256xf32>
    %c0_3 = arith.constant 0 : index
    %c0_4 = arith.constant 0 : index
    %4 = vector.load %arg4[%c0_3, %c0_4] : memref<2x256xf32, #tpu.memory_space<vmem>>, vector<2x256xf32>
    tpu.vector_store %arg4[%c0_3, %c0_4], %3 {strides = array<i32>} : memref<2x256xf32, #tpu.memory_space<vmem>>, vector<2x256xf32>,
    return
  }
  func.func @transform_0(%arg0: i32, %arg1: i32) -> (i32, i32) {
    %c0_i32 = arith.constant 0 : i32
    return %arg0, %arg1 : i32, i32
  }
  func.func @transform_1(%arg0: i32, %arg1: i32) -> (i32, i32) {
    %c0_i32 = arith.constant 0 : i32
    %c0_i32_0 = arith.constant 0 : i32
    return %c0_i32, %arg1 : i32, i32
  }
  func.func @transform_2(%arg0: i32, %arg1: i32) -> (i32, i32) {
    %c0_i32 = arith.constant 0 : i32
    return %arg0, %arg1 : i32, i32
  }
}

</mosaic_0001>

<llo_original>
// kernel: tpu_custom_call.1
$region0: #{tpu_custom_call.1}
  #allocation0 [shape = 'u32[]', space=smem, size = 0x4, offset = 0x4, fixed_abs, tag = 'smem constant byte address 0x4 - core index']
  #allocation1 [shape = 'u32[144,128]{1,0:T(1,128)}', space=vmem, size = 0x12000, scoped, tag = 'internal scratch']
  %s0 = inlined_call_operand.hbm [shape: f32[2,256], index: 0, kind: input, shape index: {}, may-alias: {0,2}]
  %s1 = inlined_call_operand.vmem [shape: f32[1,256], index: 1, kind: input, shape index: {}]
  %s2 = inlined_call_operand.hbm [shape: f32[2,256], index: 2, kind: output, shape index: {}, may-alias: {0,2}]
  %s3 = sld [smem:[#allocation0]]
  $region22: #{tpu_custom_call.1} parent=0
    _
  %s5 = ssub.s32 1, %s3
  %s6 = scalar_select 0, %s5, %s3
  $region1: #{tpu_custom_call.1} parent=0
    #allocation2 [shape = 'u8[2048]{0}', space=vmem, size = 0x800, scoped, tag = 'input window, operand 0, single buffered']
    #allocation3 [shape = 's32[1]{0}', space=sflag, size = 0x4, scoped, tag = 'scoped memory for tpu_custom_call.1']
    #allocation4 [shape = 's32[1]{0}', space=sflag, size = 0x4, scoped, tag = 'scoped memory for tpu_custom_call.1']
    #allocation5 [shape = 'u8[2048]{0}', space=vmem, size = 0x800, scoped, tag = 'output window, operand 0, single buffered']
    %7 = vsyncpa [#allocation3], 0
    %8 = vsyncpa [#allocation4], 0
    // Predicated region
    $region2: #{tpu_custom_call.1} parent=1 // pred_check
      _
    $region3: #{tpu_custom_call.1} parent=1 // pred_check_branch
      %10 = sbr.rel (0) target = $region5
    $region4: #{tpu_custom_call.1} parent=1 // pred_region
      %s12 = ssub.s32 64, 64
      %13 = vsyncadd [#allocation3], %s12
      %s15 = sshll.u32 [#allocation2], 4
      %s16 = int_to_ptr.vmem [resolvable:$true] %s15
      %18 = dma.hbm_to_vmem [thread:$0]  %s0, 64, %s16, [#allocation3]
    $region5: #{tpu_custom_call.1} parent=1 // pred_fallthru
      _
    // Predicated region
    $region6: #{tpu_custom_call.1} parent=1 // pred_check
      _
    $region7: #{tpu_custom_call.1} parent=1 // pred_check_branch
      %20 = sbr.rel (0) target = $region9
    $region8: #{tpu_custom_call.1} parent=1 // pred_region
      _
    $region9: #{tpu_custom_call.1} parent=1 // pred_fallthru
      _
    // Predicated region
    $region10: #{tpu_custom_call.1} parent=1 // pred_check
      _
    $region11: #{tpu_custom_call.1} parent=1 // pred_check_branch
      %22 = sbr.rel (0) target = $region13
    $region12: #{tpu_custom_call.1} parent=1 // pred_region
      %23 = dma.done [#allocation3], 64
    $region13: #{tpu_custom_call.1} parent=1 // pred_fallthru
      _
    %v24 = vld [vmem:[#allocation2] sm:$0xf]
    %v25 = vld [vmem:[%s1] sm:$0x3]
    %v27 = vlaneseq
    %v28 = vshrl.u32 %v27, 7
    %v29 = vsub.s32 0, %v28
    %v30 = vrot.slane %v25, %v29
    %v31 = vlaneseq
    %v32 = vshrl.u32 %v31, 7
    %v33 = vsub.s32 1, %v32
    %v34 = vrot.slane %v25, %v33
    %v35 = vcombine.low %v30, %v34
    %v37 = vunpack.c.l.s4 1983009808
    %v38 = vunpack.c.0.s8 %v37
    %v39 = vlaneseq
    %v40 = vshrl.u32 %v39, 7
    %v41 = vsub.s32 %v38, %v40
    %v42 = vrot.slane %v35, %v41
    %v44 = vadd.f32 %v24, %v42
    %45 = vst [vmem:[#allocation5] sm:$0xf] %v44
    // Predicated region
    $region14: #{tpu_custom_call.1} parent=1 // pred_check
      _
    $region15: #{tpu_custom_call.1} parent=1 // pred_check_branch
      %47 = sbr.rel (0) target = $region17
    $region16: #{tpu_custom_call.1} parent=1 // pred_region
      %s49 = ssub.s32 64, 64
      %50 = vsyncadd [#allocation4], %s49
      %s52 = sshll.u32 [#allocation5], 4
      %s53 = int_to_ptr.vmem [resolvable:$true] %s52
      %55 = dma.vmem_to_hbm [thread:$0]  %s53, 64, %s2, [#allocation4]
    $region17: #{tpu_custom_call.1} parent=1 // pred_fallthru
      _
    // Predicated region
    $region18: #{tpu_custom_call.1} parent=1 // pred_check
      _
    $region19: #{tpu_custom_call.1} parent=1 // pred_check_branch
      %57 = sbr.rel (0) target = $region21
    $region20: #{tpu_custom_call.1} parent=1 // pred_region
      %58 = dma.done [#allocation4], 64
    $region21: #{tpu_custom_call.1} parent=1 // pred_fallthru
      _
    %59 = vsyncpa [#allocation3], 1
    %60 = vsyncpa [#allocation4], 1

</llo_original>
